<compile_context>
chip_gen: v6e
topology: v6e:2x2x1
jax: 0.10.0
libtpu: 0.0.40
codegen_flags: <defaults>
</compile_context>

<pallas_src>
import jax
import jax.numpy as jnp
from jax.experimental import pallas as pl
from jax.experimental.pallas import tpu as pltpu


# --------------------------------------------------------------------------------------
# Kernel: one grid step processes a (rows, BN) lane-block of the batch.
# --------------------------------------------------------------------------------------
def eve_kernel(x_ref, wl_ref, bl_ref,
               m1_ref, b1_ref, m2_ref, b2_ref,
               m3_ref, b3_ref, m4_ref, b4_ref,
               o_ref):
    # Linear(P -> 2P): (2P, P) @ (P, BN) on the MXU, bf16 inputs, f32 accumulate.
    h = jnp.dot(wl_ref[...], x_ref[...], preferred_element_type=jnp.float32) + bl_ref[...]
    a = jax.nn.sigmoid(h)                                                   # (2P, BN) f32

    # Conv1d(1->2, k=4, s=1) as one banded matmul (channel-stacked rows).
    a = jax.nn.sigmoid(
        jnp.dot(m1_ref[...], a, preferred_element_type=jnp.float32) + b1_ref[...])   # (2*L1, BN)

    # Conv1d(2->4, k=2, s=2): stride-2 tap selection folded into the matrix.
    a = jax.nn.sigmoid(
        jnp.dot(m2_ref[...], a, preferred_element_type=jnp.float32) + b2_ref[...])   # (4*L2, BN)

    # Conv1d(4->4, k=1) pointwise, as kron(W3, I).
    a = jax.nn.sigmoid(
        jnp.dot(m3_ref[...], a, preferred_element_type=jnp.float32) + b3_ref[...])   # (4*L2, BN)

    # Conv1d(4->1, k=1, p=1): kron(W4, I) with two zero (bias-only) edge rows folded in.
    z = jnp.dot(m4_ref[...], a, preferred_element_type=jnp.float32) + b4_ref[...]    # (P, BN)

    o_ref[...] = jnp.tanh(z)   # single lane-dense (P, BN) store


# --------------------------------------------------------------------------------------
# Wrapper: layout plumbing + folding the conv stack into small matrices.
# --------------------------------------------------------------------------------------
def _band(taps, l_out, l_in, stride):
    """M[i, stride*i + t] = taps[t] (cross-correlation, matches PyTorch Conv1d)."""
    r = jnp.arange(l_out)[:, None]
    c = jnp.arange(l_in)[None, :]
    m = jnp.zeros((l_out, l_in), jnp.float32)
    for t in range(int(taps.shape[0])):
        m = m + taps[t] * (c == stride * r + t).astype(jnp.float32)
    return m


def eve_forward(x, params, linear_dtype=jnp.bfloat16):
    wl, bl, w1, b1, w2, b2, w3, b3, w4, b4 = params
    B, P = x.shape
    L0 = 2 * P
    L1 = L0 - 3                   # after conv1 (k=4, s=1)
    L2 = (L1 - 2) // 2 + 1        # after conv2 (k=2, s=2)
    assert L2 + 2 == P            # conv4 (k=1, p=1) restores length P

    # ---- batch-on-lanes: adaptive lane block (multiple of 128, up to 512) ----
    BN = min(512, pl.cdiv(B, 128) * 128)
    Bp = pl.cdiv(B, BN) * BN
    grid = (Bp // BN,)

    xT = jnp.pad(x, ((0, Bp - B), (0, 0))).T.astype(linear_dtype)     # (P, Bp)
    wl_c = wl.astype(linear_dtype)                                    # (2P, P) native (out,in) layout

    # ---- fold each Conv1d into a matrix acting on channel-stacked (rows, batch) slabs ----
    M1 = jnp.concatenate([_band(w1[o, 0], L1, L0, 1) for o in range(2)], axis=0)        # (2L1, 2P)
    M2 = jnp.concatenate(
        [jnp.concatenate([_band(w2[o, c], L2, L1, 2) for c in range(2)], axis=1)
         for o in range(4)], axis=0)                                                    # (4L2, 2L1)
    eye2 = jnp.eye(L2, dtype=jnp.float32)
    M3 = jnp.kron(w3[:, :, 0], eye2)                                                    # (4L2, 4L2)
    M4 = jnp.concatenate(
        [jnp.zeros((1, 4 * L2), jnp.float32),
         jnp.kron(w4[:, :, 0], eye2),
         jnp.zeros((1, 4 * L2), jnp.float32)], axis=0)                                  # (P, 4L2)

    # per-row bias columns (broadcast over lanes in-kernel)
    bl_c = bl.reshape(L0, 1).astype(jnp.float32)
    b1_c = jnp.repeat(b1, L1).reshape(2 * L1, 1)
    b2_c = jnp.repeat(b2, L2).reshape(4 * L2, 1)
    b3_c = jnp.repeat(b3, L2).reshape(4 * L2, 1)
    b4_c = jnp.full((P, 1), b4[0], jnp.float32)

    batch_blk = lambda rows: pl.BlockSpec((rows, BN), lambda i: (0, i))
    const_blk = lambda arr: pl.BlockSpec(arr.shape, lambda i: (0, 0))   # VMEM-resident

    outT = pl.pallas_call(
        eve_kernel,
        out_shape=jax.ShapeDtypeStruct((P, Bp), jnp.float32),
        grid_spec=pltpu.PrefetchScalarGridSpec(
            num_scalar_prefetch=0,
            grid=grid,
            in_specs=[
                batch_blk(P),                      # xT
                const_blk(wl_c), const_blk(bl_c),  # Linear
                const_blk(M1), const_blk(b1_c),    # conv1
                const_blk(M2), const_blk(b2_c),    # conv2
                const_blk(M3), const_blk(b3_c),    # conv3
                const_blk(M4), const_blk(b4_c),    # conv4 (+ padded edges)
            ],
            out_specs=batch_blk(P),
        ),
        compiler_params=pltpu.CompilerParams(dimension_semantics=("parallel",)),
    )(xT, wl_c, bl_c, M1, b1_c, M2, b2_c, M3, b3_c, M4, b4_c)

    return outT.T[:B]                                                  # (B, P)


# --------------------------------------------------------------------------------------
# Deterministic parameter init (shapes from Eve.__init__)
# --------------------------------------------------------------------------------------
def init_params(key, P):
    ks = jax.random.split(key, 10)

    def u(k, shape, fan_in):
        bound = 1.0 / (fan_in ** 0.5)
        return jax.random.uniform(k, shape, jnp.float32, -bound, bound)

    wl = u(ks[0], (2 * P, P), P)          # nn.Linear(P, 2P) weight (out, in)
    bl = u(ks[1], (2 * P,), P)
    w1 = u(ks[2], (2, 1, 4), 4)           # Conv1d(1, 2, k=4)
    b1 = u(ks[3], (2,), 4)
    w2 = u(ks[4], (4, 2, 2), 4)           # Conv1d(2, 4, k=2, s=2)
    b2 = u(ks[5], (4,), 4)
    w3 = u(ks[6], (4, 4, 1), 4)           # Conv1d(4, 4, k=1)
    b3 = u(ks[7], (4,), 4)
    w4 = u(ks[8], (1, 4, 1), 4)           # Conv1d(4, 1, k=1, p=1)
    b4 = u(ks[9], (1,), 4)
    return (wl, bl, w1, b1, w2, b2, w3, b3, w4, b4)


# --------------------------------------------------------------------------------------
# Plain-JAX reference (exact f32 conv math; linear_dtype mirrors the kernel's MXU cast)
# --------------------------------------------------------------------------------------
def eve_reference(x, params, linear_dtype=jnp.float32):
    wl, bl, w1, b1, w2, b2, w3, b3, w4, b4 = params
    h = jnp.dot(x.astype(linear_dtype), wl.astype(linear_dtype).T,
                preferred_element_type=jnp.float32) + bl
    a = h[:, None, :]                     # (B, 1, 2P)  NCL
    for w, b, stride, pad in [(w1, b1, 1, 0), (w2, b2, 2, 0), (w3, b3, 1, 0), (w4, b4, 1, 1)]:
        a = jax.nn.sigmoid(a)
        if pad:
            a = jnp.pad(a, ((0, 0), (0, 0), (pad, pad)))
        Bb, C, L = a.shape
        O, _, K = w.shape
        Lo = (L - K) // stride + 1
        rows = []
        for o in range(O):
            row = jnp.zeros((Bb, Lo), jnp.float32) + b[o]
            for c in range(C):
                for t in range(K):
                    row = row + w[o, c, t] * a[:, c, t:t + (Lo - 1) * stride + 1:stride]
            rows.append(row)
        a = jnp.stack(rows, axis=1)
    return jnp.tanh(a.reshape(a.shape[0], -1))


if __name__ == "__main__":
    P = 16   # plaintext length (output length == P)
    key = jax.random.PRNGKey(0)
    kx1, kx2, kp = jax.random.split(key, 3)
    params = init_params(kp, P)

    fwd = jax.jit(eve_forward)

    # B=4: toy size (pads to one 128-lane block); B=300: pads to a single 384-lane block.
    for B, kk in ((4, kx1), (300, kx2)):
        x = jax.random.uniform(kk, (B, P), jnp.float32, -1.0, 1.0)
        y = jax.block_until_ready(fwd(x, params))
        assert y.shape == (B, P), y.shape

        y_ref_bf = eve_reference(x, params, jnp.bfloat16)   # matches kernel's bf16 Linear
        y_ref_f32 = eve_reference(x, params, jnp.float32)   # full-precision sanity check
        err_bf = float(jnp.max(jnp.abs(y - y_ref_bf)))
        err_f32 = float(jnp.max(jnp.abs(y - y_ref_f32)))
        assert jnp.allclose(y, y_ref_bf, atol=1e-4, rtol=1e-4), err_bf
        assert jnp.allclose(y, y_ref_f32, atol=3e-2, rtol=0.0), err_f32

    print("KERNEL_OK")
</pallas_src>

<mosaic_0001>
module attributes {stable_mosaic.version = 11 : i64} {
  func.func @eve_kernel(%arg0: i32, %arg1: memref<16x128xbf16, #tpu.memory_space<vmem>>, %arg2: memref<32x16xbf16, #tpu.memory_space<vmem>>, %arg3: memref<32x1xf32, #tpu.memory_space<vmem>>, %arg4: memref<58x32xf32, #tpu.memory_space<vmem>>, %arg5: memref<58x1xf32, #tpu.memory_space<vmem>>, %arg6: memref<56x58xf32, #tpu.memory_space<vmem>>, %arg7: memref<56x1xf32, #tpu.memory_space<vmem>>, %arg8: memref<56x56xf32, #tpu.memory_space<vmem>>, %arg9: memref<56x1xf32, #tpu.memory_space<vmem>>, %arg10: memref<16x56xf32, #tpu.memory_space<vmem>>, %arg11: memref<16x1xf32, #tpu.memory_space<vmem>>, %arg12: memref<16x128xf32, #tpu.memory_space<vmem>>) attributes {dimension_semantics = [#tpu.dimension_semantics<parallel>], iteration_bounds = array<i64: 1>, scalar_prefetch = 0 : i64, scratch_operands = 0 : i64, tpu.core_type = #tpu.core_type<tc>, window_params = [{transform_indices = @transform_0, window_bounds = array<i64: 16, 128>}, {pipeline_mode = #tpu.pipeline_mode<synchronous>, transform_indices = @transform_1, window_bounds = array<i64: 32, 16>}, {pipeline_mode = #tpu.pipeline_mode<synchronous>, transform_indices = @transform_2, window_bounds = array<i64: 32, 1>}, {pipeline_mode = #tpu.pipeline_mode<synchronous>, transform_indices = @transform_3, window_bounds = array<i64: 58, 32>}, {pipeline_mode = #tpu.pipeline_mode<synchronous>, transform_indices = @transform_4, window_bounds = array<i64: 58, 1>}, {pipeline_mode = #tpu.pipeline_mode<synchronous>, transform_indices = @transform_5, window_bounds = array<i64: 56, 58>}, {pipeline_mode = #tpu.pipeline_mode<synchronous>, transform_indices = @transform_6, window_bounds = array<i64: 56, 1>}, {pipeline_mode = #tpu.pipeline_mode<synchronous>, transform_indices = @transform_7, window_bounds = array<i64: 56, 56>}, {pipeline_mode = #tpu.pipeline_mode<synchronous>, transform_indices = @transform_8, window_bounds = array<i64: 56, 1>}, {pipeline_mode = #tpu.pipeline_mode<synchronous>, transform_indices = @transform_9, window_bounds = array<i64: 16, 56>}, {pipeline_mode = #tpu.pipeline_mode<synchronous>, transform_indices = @transform_10, window_bounds = array<i64: 16, 1>}, {transform_indices = @transform_11, window_bounds = array<i64: 16, 128>}]} {
    %c0 = arith.constant 0 : index
    %c0_0 = arith.constant 0 : index
    %0 = vector.load %arg2[%c0, %c0_0] : memref<32x16xbf16, #tpu.memory_space<vmem>>, vector<32x16xbf16>
    %c0_1 = arith.constant 0 : index
    %c0_2 = arith.constant 0 : index
    %1 = vector.load %arg1[%c0_1, %c0_2] : memref<16x128xbf16, #tpu.memory_space<vmem>>, vector<16x128xbf16>
    %cst = arith.constant dense<0.000000e+00> : vector<32x128xf32>
    %2 = tpu.matmul %0, %1, %cst {dimension_numbers = #tpu.dot_dimension_numbers<[1], [0], [0], [1], [0, 0, 1, 1], [], []>} : vector<32x16xbf16>, vector<16x128xbf16>, vector<32x128xf32> -> vector<32x128xf32>
    %c0_3 = arith.constant 0 : index
    %c0_4 = arith.constant 0 : index
    %3 = vector.load %arg3[%c0_3, %c0_4] : memref<32x1xf32, #tpu.memory_space<vmem>>, vector<32x1xf32>
    %4 = vector.broadcast %3 : vector<32x1xf32> to vector<32x128xf32>
    %5 = arith.addf %2, %4 : vector<32x128xf32>
    %6 = arith.negf %5 : vector<32x128xf32>
    %7 = math.exp %6 : vector<32x128xf32>
    %cst_5 = arith.constant 1.000000e+00 : f32
    %8 = vector.broadcast %cst_5 : f32 to vector<32x128xf32>
    %9 = arith.addf %8, %7 : vector<32x128xf32>
    %10 = arith.divf %8, %9 : vector<32x128xf32>
    %c0_6 = arith.constant 0 : index
    %c0_7 = arith.constant 0 : index
    %11 = vector.load %arg4[%c0_6, %c0_7] : memref<58x32xf32, #tpu.memory_space<vmem>>, vector<58x32xf32>
    %cst_8 = arith.constant dense<0.000000e+00> : vector<58x128xf32>
    %12 = tpu.matmul %11, %10, %cst_8 {dimension_numbers = #tpu.dot_dimension_numbers<[1], [0], [0], [1], [0, 0, 1, 1], [], []>} : vector<58x32xf32>, vector<32x128xf32>, vector<58x128xf32> -> vector<58x128xf32>
    %c0_9 = arith.constant 0 : index
    %c0_10 = arith.constant 0 : index
    %13 = vector.load %arg5[%c0_9, %c0_10] : memref<58x1xf32, #tpu.memory_space<vmem>>, vector<58x1xf32>
    %14 = vector.broadcast %13 : vector<58x1xf32> to vector<58x128xf32>
    %15 = arith.addf %12, %14 : vector<58x128xf32>
    %16 = arith.negf %15 : vector<58x128xf32>
    %17 = math.exp %16 : vector<58x128xf32>
    %cst_11 = arith.constant 1.000000e+00 : f32
    %18 = vector.broadcast %cst_11 : f32 to vector<58x128xf32>
    %19 = arith.addf %18, %17 : vector<58x128xf32>
    %20 = arith.divf %18, %19 : vector<58x128xf32>
    %c0_12 = arith.constant 0 : index
    %c0_13 = arith.constant 0 : index
    %21 = vector.load %arg6[%c0_12, %c0_13] : memref<56x58xf32, #tpu.memory_space<vmem>>, vector<56x58xf32>
    %cst_14 = arith.constant dense<0.000000e+00> : vector<56x128xf32>
    %22 = tpu.matmul %21, %20, %cst_14 {dimension_numbers = #tpu.dot_dimension_numbers<[1], [0], [0], [1], [0, 0, 1, 1], [], []>} : vector<56x58xf32>, vector<58x128xf32>, vector<56x128xf32> -> vector<56x128xf32>
    %c0_15 = arith.constant 0 : index
    %c0_16 = arith.constant 0 : index
    %23 = vector.load %arg7[%c0_15, %c0_16] : memref<56x1xf32, #tpu.memory_space<vmem>>, vector<56x1xf32>
    %24 = vector.broadcast %23 : vector<56x1xf32> to vector<56x128xf32>
    %25 = arith.addf %22, %24 : vector<56x128xf32>
    %26 = arith.negf %25 : vector<56x128xf32>
    %27 = math.exp %26 : vector<56x128xf32>
    %cst_17 = arith.constant 1.000000e+00 : f32
    %28 = vector.broadcast %cst_17 : f32 to vector<56x128xf32>
    %29 = arith.addf %28, %27 : vector<56x128xf32>
    %30 = arith.divf %28, %29 : vector<56x128xf32>
    %c0_18 = arith.constant 0 : index
    %c0_19 = arith.constant 0 : index
    %31 = vector.load %arg8[%c0_18, %c0_19] : memref<56x56xf32, #tpu.memory_space<vmem>>, vector<56x56xf32>
    %cst_20 = arith.constant dense<0.000000e+00> : vector<56x128xf32>
    %32 = tpu.matmul %31, %30, %cst_20 {dimension_numbers = #tpu.dot_dimension_numbers<[1], [0], [0], [1], [0, 0, 1, 1], [], []>} : vector<56x56xf32>, vector<56x128xf32>, vector<56x128xf32> -> vector<56x128xf32>
    %c0_21 = arith.constant 0 : index
    %c0_22 = arith.constant 0 : index
    %33 = vector.load %arg9[%c0_21, %c0_22] : memref<56x1xf32, #tpu.memory_space<vmem>>, vector<56x1xf32>
    %34 = vector.broadcast %33 : vector<56x1xf32> to vector<56x128xf32>
    %35 = arith.addf %32, %34 : vector<56x128xf32>
    %36 = arith.negf %35 : vector<56x128xf32>
    %37 = math.exp %36 : vector<56x128xf32>
    %cst_23 = arith.constant 1.000000e+00 : f32
    %38 = vector.broadcast %cst_23 : f32 to vector<56x128xf32>
    %39 = arith.addf %38, %37 : vector<56x128xf32>
    %40 = arith.divf %38, %39 : vector<56x128xf32>
    %c0_24 = arith.constant 0 : index
    %c0_25 = arith.constant 0 : index
    %41 = vector.load %arg10[%c0_24, %c0_25] : memref<16x56xf32, #tpu.memory_space<vmem>>, vector<16x56xf32>
    %cst_26 = arith.constant dense<0.000000e+00> : vector<16x128xf32>
    %42 = tpu.matmul %41, %40, %cst_26 {dimension_numbers = #tpu.dot_dimension_numbers<[1], [0], [0], [1], [0, 0, 1, 1], [], []>} : vector<16x56xf32>, vector<56x128xf32>, vector<16x128xf32> -> vector<16x128xf32>
    %c0_27 = arith.constant 0 : index
    %c0_28 = arith.constant 0 : index
    %43 = vector.load %arg11[%c0_27, %c0_28] : memref<16x1xf32, #tpu.memory_space<vmem>>, vector<16x1xf32>
    %44 = vector.broadcast %43 : vector<16x1xf32> to vector<16x128xf32>
    %45 = arith.addf %42, %44 : vector<16x128xf32>
    %46 = math.tanh %45 : vector<16x128xf32>
    %c0_29 = arith.constant 0 : index
    %c0_30 = arith.constant 0 : index
    %47 = vector.load %arg12[%c0_29, %c0_30] : memref<16x128xf32, #tpu.memory_space<vmem>>, vector<16x128xf32>
    tpu.vector_store %arg12[%c0_29, %c0_30], %46 {strides = array<i32>} : memref<16x128xf32, #tpu.memory_space<vmem>>, vector<16x128xf32>,
    return
  }
  func.func @transform_0(%arg0: i32) -> (i32, i32) {
    %c0_i32 = arith.constant 0 : i32
    %c0_i32_0 = arith.constant 0 : i32
    return %c0_i32, %arg0 : i32, i32
  }
  func.func @transform_1(%arg0: i32) -> (i32, i32) {
    %c0_i32 = arith.constant 0 : i32
    %c0_i32_0 = arith.constant 0 : i32
    %c0_i32_1 = arith.constant 0 : i32
    return %c0_i32, %c0_i32_0 : i32, i32
  }
  func.func @transform_2(%arg0: i32) -> (i32, i32) {
    %c0_i32 = arith.constant 0 : i32
    %c0_i32_0 = arith.constant 0 : i32
    %c0_i32_1 = arith.constant 0 : i32
    return %c0_i32, %c0_i32_0 : i32, i32
  }
  func.func @transform_3(%arg0: i32) -> (i32, i32) {
    %c0_i32 = arith.constant 0 : i32
    %c0_i32_0 = arith.constant 0 : i32
    %c0_i32_1 = arith.constant 0 : i32
    return %c0_i32, %c0_i32_0 : i32, i32
  }
  func.func @transform_4(%arg0: i32) -> (i32, i32) {
    %c0_i32 = arith.constant 0 : i32
    %c0_i32_0 = arith.constant 0 : i32
    %c0_i32_1 = arith.constant 0 : i32
    return %c0_i32, %c0_i32_0 : i32, i32
  }
  func.func @transform_5(%arg0: i32) -> (i32, i32) {
    %c0_i32 = arith.constant 0 : i32
    %c0_i32_0 = arith.constant 0 : i32
    %c0_i32_1 = arith.constant 0 : i32
    return %c0_i32, %c0_i32_0 : i32, i32
  }
  func.func @transform_6(%arg0: i32) -> (i32, i32) {
    %c0_i32 = arith.constant 0 : i32
    %c0_i32_0 = arith.constant 0 : i32
    %c0_i32_1 = arith.constant 0 : i32
    return %c0_i32, %c0_i32_0 : i32, i32
  }
  func.func @transform_7(%arg0: i32) -> (i32, i32) {
    %c0_i32 = arith.constant 0 : i32
    %c0_i32_0 = arith.constant 0 : i32
    %c0_i32_1 = arith.constant 0 : i32
    return %c0_i32, %c0_i32_0 : i32, i32
  }
  func.func @transform_8(%arg0: i32) -> (i32, i32) {
    %c0_i32 = arith.constant 0 : i32
    %c0_i32_0 = arith.constant 0 : i32
    %c0_i32_1 = arith.constant 0 : i32
    return %c0_i32, %c0_i32_0 : i32, i32
  }
  func.func @transform_9(%arg0: i32) -> (i32, i32) {
    %c0_i32 = arith.constant 0 : i32
    %c0_i32_0 = arith.constant 0 : i32
    %c0_i32_1 = arith.constant 0 : i32
    return %c0_i32, %c0_i32_0 : i32, i32
  }
  func.func @transform_10(%arg0: i32) -> (i32, i32) {
    %c0_i32 = arith.constant 0 : i32
    %c0_i32_0 = arith.constant 0 : i32
    %c0_i32_1 = arith.constant 0 : i32
    return %c0_i32, %c0_i32_0 : i32, i32
  }
  func.func @transform_11(%arg0: i32) -> (i32, i32) {
    %c0_i32 = arith.constant 0 : i32
    %c0_i32_0 = arith.constant 0 : i32
    return %c0_i32, %arg0 : i32, i32
  }
}

</mosaic_0001>

<llo_original>
// kernel: eve_forward.1
$region0: #{eve_forward.1}
  #allocation0 [shape = 'u32[]', space=smem, size = 0x4, offset = 0x4, fixed_abs, tag = 'smem constant byte address 0x4 - core index']
  #allocation1 [shape = 'u32[144,128]{1,0:T(1,128)}', space=vmem, size = 0x12000, scoped, tag = 'internal scratch']
  %s0 = inlined_call_operand.vmem [shape: bf16[16,128], index: 0, kind: input, shape index: {}]
  %s1 = inlined_call_operand.vmem [shape: bf16[32,16], index: 1, kind: input, shape index: {}]
  %s2 = inlined_call_operand.vmem [shape: f32[32,1], index: 2, kind: input, shape index: {}]
  %s3 = inlined_call_operand.vmem [shape: f32[58,32], index: 3, kind: input, shape index: {}]
  %s4 = inlined_call_operand.vmem [shape: f32[58,1], index: 4, kind: input, shape index: {}]
  %s5 = inlined_call_operand.vmem [shape: f32[56,58], index: 5, kind: input, shape index: {}]
  %s6 = inlined_call_operand.vmem [shape: f32[56,1], index: 6, kind: input, shape index: {}]
  %s7 = inlined_call_operand.vmem [shape: f32[56,56], index: 7, kind: input, shape index: {}]
  %s8 = inlined_call_operand.vmem [shape: f32[56,1], index: 8, kind: input, shape index: {}]
  %s9 = inlined_call_operand.vmem [shape: f32[16,56], index: 9, kind: input, shape index: {}]
  %s10 = inlined_call_operand.vmem [shape: f32[16,1], index: 10, kind: input, shape index: {}]
  %s11 = inlined_call_operand.vmem [shape: f32[16,128], index: 11, kind: output, shape index: {}]
  %s12 = sld [smem:[#allocation0]]
  $region54: #{eve_forward.1} parent=0
    _
  %s14 = ssub.s32 1, %s12
  %s15 = scalar_select 0, %s14, %s12
  // Predicated region
  $region2: #{eve_forward.1} parent=0 // pred_check
    _
  $region3: #{eve_forward.1} parent=0 // pred_check_branch
    %17 = sbr.rel (0) target = $region5
  $region4: #{eve_forward.1} parent=0 // pred_region
    _
  $region5: #{eve_forward.1} parent=0 // pred_fallthru
    _
  // Predicated region
  $region6: #{eve_forward.1} parent=0 // pred_check
    _
  $region7: #{eve_forward.1} parent=0 // pred_check_branch
    %19 = sbr.rel (0) target = $region9
  $region8: #{eve_forward.1} parent=0 // pred_region
    _
  $region9: #{eve_forward.1} parent=0 // pred_fallthru
    _
  // Predicated region
  $region10: #{eve_forward.1} parent=0 // pred_check
    _
  $region11: #{eve_forward.1} parent=0 // pred_check_branch
    %21 = sbr.rel (0) target = $region13
  $region12: #{eve_forward.1} parent=0 // pred_region
    _
  $region13: #{eve_forward.1} parent=0 // pred_fallthru
    _
  // Predicated region
  $region14: #{eve_forward.1} parent=0 // pred_check
    _
  $region15: #{eve_forward.1} parent=0 // pred_check_branch
    %23 = sbr.rel (0) target = $region17
  $region16: #{eve_forward.1} parent=0 // pred_region
    _
  $region17: #{eve_forward.1} parent=0 // pred_fallthru
    _
  // Predicated region
  $region18: #{eve_forward.1} parent=0 // pred_check
    _
  $region19: #{eve_forward.1} parent=0 // pred_check_branch
    %25 = sbr.rel (0) target = $region21
  $region20: #{eve_forward.1} parent=0 // pred_region
    _
  $region21: #{eve_forward.1} parent=0 // pred_fallthru
    _
  // Predicated region
  $region22: #{eve_forward.1} parent=0 // pred_check
    _
  $region23: #{eve_forward.1} parent=0 // pred_check_branch
    %27 = sbr.rel (0) target = $region25
  $region24: #{eve_forward.1} parent=0 // pred_region
    _
  $region25: #{eve_forward.1} parent=0 // pred_fallthru
    _
  // Predicated region
  $region26: #{eve_forward.1} parent=0 // pred_check
    _
  $region27: #{eve_forward.1} parent=0 // pred_check_branch
    %29 = sbr.rel (0) target = $region29
  $region28: #{eve_forward.1} parent=0 // pred_region
    _
  $region29: #{eve_forward.1} parent=0 // pred_fallthru
    _
  // Predicated region
  $region30: #{eve_forward.1} parent=0 // pred_check
    _
  $region31: #{eve_forward.1} parent=0 // pred_check_branch
    %31 = sbr.rel (0) target = $region33
  $region32: #{eve_forward.1} parent=0 // pred_region
    _
  $region33: #{eve_forward.1} parent=0 // pred_fallthru
    _
  // Predicated region
  $region34: #{eve_forward.1} parent=0 // pred_check
    _
  $region35: #{eve_forward.1} parent=0 // pred_check_branch
    %33 = sbr.rel (0) target = $region37
  $region36: #{eve_forward.1} parent=0 // pred_region
    _
  $region37: #{eve_forward.1} parent=0 // pred_fallthru
    _
  // Predicated region
  $region38: #{eve_forward.1} parent=0 // pred_check
    _
  $region39: #{eve_forward.1} parent=0 // pred_check_branch
    %35 = sbr.rel (0) target = $region41
  $region40: #{eve_forward.1} parent=0 // pred_region
    _
  $region41: #{eve_forward.1} parent=0 // pred_fallthru
    _
  // Predicated region
  $region42: #{eve_forward.1} parent=0 // pred_check
    _
  $region43: #{eve_forward.1} parent=0 // pred_check_branch
    %37 = sbr.rel (0) target = $region45
  $region44: #{eve_forward.1} parent=0 // pred_region
    _
  $region45: #{eve_forward.1} parent=0 // pred_fallthru
    _
  %v39 = vld [vmem:[%s1] sm:$0xf]
  %v40 = vld [vmem:[%s1 + $0x4] sm:$0xf]
  %v41 = vld [vmem:[%s1 + $0x8] sm:$0xf]
  %v42 = vld [vmem:[%s1 + $0xc] sm:$0xf]
  %v43 = vld [vmem:[%s0] sm:$0xf]
  %v44 = vld [vmem:[%s0 + $0x4] sm:$0xf]
  %v45 = vld [vmem:[%s2] sm:$0xff]
  %v46 = vld [vmem:[%s2 + $0x8] sm:$0xff]
  %v47 = vld [vmem:[%s2 + $0x10] sm:$0xff]
  %v48 = vld [vmem:[%s2 + $0x18] sm:$0xff]
  %50 = vset.pattern.permute.xlu0 0
  %51 = vperm.xlu0 %50, %v45
  %v52 = vpop.permute.xlu0 %51
  %55 = vset.pattern.permute.xlu0 0
  %56 = vperm.xlu0 %55, %v46
  %v57 = vpop.permute.xlu0 %56
  %60 = vset.pattern.permute.xlu0 0
  %61 = vperm.xlu0 %60, %v47
  %v62 = vpop.permute.xlu0 %61
  %65 = vset.pattern.permute.xlu0 0
  %66 = vperm.xlu0 %65, %v48
  %v67 = vpop.permute.xlu0 %66
  %v73 = vunpack.c.l.b16 %v39
  %v74 = vunpack.c.l.b16 %v40
  %v75 = vunpack.c.l.b16 %v41
  %v76 = vunpack.c.l.b16 %v42
  %v77 = vpack.c.b16 %v74, %v73
  %v78 = vpack.c.b16 %v76, %v75
  %v81 = vunpack.c.l.b16 %v43
  %v82 = vunpack.c.l.b16 %v44
  %v83 = vpack.c.b16 %v82, %v81
  %vm85 = vcmask 130048
  %v87 = vsel %vm85, %v77, 0
  %v90 = vsel %vm85, %v78, 0
  %92 = vmatprep.subr.bf16.mxu0 0
  %93 = vmatpush1.bf16.msra.mxu0 0
  %94 = vmatprep.subr.bf16.mxu0 0
  %95 = vmatpush1.bf16.msra.mxu0 0
  %96 = vmatprep.subr.bf16.mxu0 0
  %97 = vmatpush1.bf16.msra.mxu0 0
  %98 = vmatprep.subr.bf16.mxu0 0
  %99 = vmatpush1.bf16.msra.mxu0 0
  %100 = vmatprep.subr.bf16.mxu0 0
  %101 = vmatpush1.bf16.msra.mxu0 0
  %102 = vmatprep.subr.bf16.mxu0 0
  %103 = vmatpush1.bf16.msra.mxu0 0
  %104 = vmatprep.subr.bf16.mxu0 0
  %105 = vmatpush1.bf16.msra.mxu0 0
  %106 = vmatprep.subr.bf16.mxu0 0
  %107 = vmatpush1.bf16.msra.mxu0 %v83
  %108 = vmatprep.subr.bf16.mxu0 0
  %109 = vmatpush2.bf16.msra.mxu0 0
  %110 = vmatprep.subr.bf16.mxu0 0
  %111 = vmatpush2.bf16.msra.mxu0 0
  %112 = vmatprep.subr.bf16.mxu0 0
  %113 = vmatpush2.bf16.msra.mxu0 0
  %114 = vmatprep.subr.bf16.mxu0 0
  %115 = vmatpush2.bf16.msra.mxu0 0
  %116 = vmatprep.subr.bf16.mxu0 0
  %117 = vmatpush2.bf16.msra.mxu0 0
  %118 = vmatprep.subr.bf16.mxu0 0
  %119 = vmatpush2.bf16.msra.mxu0 0
  %120 = vmatprep.subr.bf16.mxu0 0
  %121 = vmatpush2.bf16.msra.mxu0 0
  %122 = vmatprep.subr.bf16.mxu0 0
  %123 = vmatpush2.bf16.msra.mxu0 0
  %124 = vmatprep.mubr.bf16.mxu0 0
  %125 = vmatmul.mubr.bf16.gmra.mxu0 %v87
  %v126 = vpop.f32.mrf.mxu0
  %v127 = vadd.f32 %v52, %v126
  %v128 = vpop.f32.mrf.mxu0
  %v129 = vpop.f32.mrf.mxu0
  %v130 = vadd.f32 %v57, %v129
  %v131 = vpop.f32.mrf.mxu0
  %132 = vmatprep.mubr.bf16.mxu0 0
  %133 = vmatmul.mubr.bf16.gmra.mxu0 %v90
  %v134 = vpop.f32.mrf.mxu0
  %v135 = vadd.f32 %v62, %v134
  %v136 = vpop.f32.mrf.mxu0
  %v137 = vpop.f32.mrf.mxu0
  %v138 = vadd.f32 %v67, %v137
  %v139 = vpop.f32.mrf.mxu0
  %140 = vdwg.mxu0
  %v141 = vxor.u32 %v127, 2147483648
  %v142 = vxor.u32 %v130, 2147483648
  %v143 = vxor.u32 %v135, 2147483648
  %v144 = vxor.u32 %v138, 2147483648
  %v145 = vmul.f32 %v141, 1.442695
  %v146 = vpow.pop %v145
  %v147 = vmul.f32 %v142, 1.442695
  %v148 = vpow.pop %v147
  %v149 = vmul.f32 %v143, 1.442695
  %v150 = vpow.pop %v149
  %v151 = vmul.f32 %v144, 1.442695
  %v152 = vpow.pop %v151
  %v153 = vadd.f32 %v146, 1.0
  %v154 = vadd.f32 %v148, 1.0
  %v155 = vadd.f32 %v150, 1.0
  %v156 = vadd.f32 %v152, 1.0
  %v157 = vrcp.pop %v153
  %v158 = vmul.f32 1.0, %v157
  %v159 = vrcp.pop %v154
  %v160 = vmul.f32 1.0, %v159
  %v161 = vrcp.pop %v155
  %v162 = vmul.f32 1.0, %v161
  %v163 = vrcp.pop %v156
  %v164 = vmul.f32 1.0, %v163
  %v165 = vld [vmem:[%s3] sm:$0xff]
  %v166 = vld [vmem:[%s3 + $0x8] sm:$0xff]
  %v167 = vld [vmem:[%s3 + $0x10] sm:$0xff]
  %v168 = vld [vmem:[%s3 + $0x18] sm:$0xff]
  %v169 = vld [vmem:[%s3 + $0x20] sm:$0xff]
  %v170 = vld [vmem:[%s3 + $0x28] sm:$0xff]
  %v171 = vld [vmem:[%s3 + $0x30] sm:$0xff]
  %v172 = vld [vmem:[%s3 + $0x38] sm:$0x3]
  %v173 = vld [vmem:[%s4] sm:$0xff]
  %v174 = vld [vmem:[%s4 + $0x8] sm:$0xff]
  %v175 = vld [vmem:[%s4 + $0x10] sm:$0xff]
  %v176 = vld [vmem:[%s4 + $0x18] sm:$0xff]
  %v177 = vld [vmem:[%s4 + $0x20] sm:$0xff]
  %v178 = vld [vmem:[%s4 + $0x28] sm:$0xff]
  %v179 = vld [vmem:[%s4 + $0x30] sm:$0xff]
  %v180 = vld [vmem:[%s4 + $0x38] sm:$0x3]
  %182 = vset.pattern.permute.xlu0 0
  %183 = vperm.xlu0 %182, %v173
  %v184 = vpop.permute.xlu0 %183
  %187 = vset.pattern.permute.xlu0 0
  %188 = vperm.xlu0 %187, %v174
  %v189 = vpop.permute.xlu0 %188
  %192 = vset.pattern.permute.xlu0 0
  %193 = vperm.xlu0 %192, %v175
  %v194 = vpop.permute.xlu0 %193
  %197 = vset.pattern.permute.xlu0 0
  %198 = vperm.xlu0 %197, %v176
  %v199 = vpop.permute.xlu0 %198
  %202 = vset.pattern.permute.xlu0 0
  %203 = vperm.xlu0 %202, %v177
  %v204 = vpop.permute.xlu0 %203
  %207 = vset.pattern.permute.xlu0 0
  %208 = vperm.xlu0 %207, %v178
  %v209 = vpop.permute.xlu0 %208
  %212 = vset.pattern.permute.xlu0 0
  %213 = vperm.xlu0 %212, %v179
  %v214 = vpop.permute.xlu0 %213
  %217 = vset.pattern.permute.xlu0 0
  %218 = vperm.xlu0 %217, %v180
  %v219 = vpop.permute.xlu0 %218
  %vm221 = vcmask 261120
  %v223 = vsel %vm221, %v165, 0
  %v226 = vsel %vm221, %v166, 0
  %v229 = vsel %vm221, %v167, 0
  %v232 = vsel %vm221, %v168, 0
  %v235 = vsel %vm221, %v169, 0
  %v238 = vsel %vm221, %v170, 0
  %v241 = vsel %vm221, %v171, 0
  %v244 = vsel %vm221, %v172, 0
  %246 = vmatprep.subr.mxu0 0.0
  %247 = vmatpush1.msra.mxu0 0.0
  %248 = vmatprep.subr.mxu0 0.0
  %249 = vmatpush1.msra.mxu0 0.0
  %250 = vmatprep.subr.mxu0 0.0
  %251 = vmatpush1.msra.mxu0 0.0
  %252 = vmatprep.subr.mxu0 0.0
  %253 = vmatpush1.msra.mxu0 0.0
  %254 = vmatprep.subr.mxu0 0.0
  %255 = vmatpush1.msra.mxu0 0.0
  %256 = vmatprep.subr.mxu0 0.0
  %257 = vmatpush1.msra.mxu0 0.0
  %258 = vmatprep.subr.mxu0 0.0
  %259 = vmatpush1.msra.mxu0 0.0
  %260 = vmatprep.subr.mxu0 0.0
  %261 = vmatpush1.msra.mxu0 0.0
  %262 = vmatprep.subr.mxu0 0.0
  %263 = vmatpush1.msra.mxu0 0.0
  %264 = vmatprep.subr.mxu0 0.0
  %265 = vmatpush1.msra.mxu0 0.0
  %266 = vmatprep.subr.mxu0 0.0
  %267 = vmatpush1.msra.mxu0 0.0
  %268 = vmatprep.subr.mxu0 0.0
  %269 = vmatpush1.msra.mxu0 0.0
  %270 = vmatprep.subr.mxu0 0.0
  %271 = vmatpush1.msra.mxu0 %v164
  %272 = vmatprep.subr.mxu0 0.0
  %273 = vmatpush1.msra.mxu0 %v162
  %274 = vmatprep.subr.mxu0 0.0
  %275 = vmatpush1.msra.mxu0 %v160
  %276 = vmatprep.subr.mxu0 0.0
  %277 = vmatpush1.msra.mxu0 %v158
  %278 = vmatprep.subr.mxu0 0.0
  %279 = vmatpush2.msra.mxu0 0.0
  %280 = vmatprep.subr.mxu0 0.0
  %281 = vmatpush2.msra.mxu0 0.0
  %282 = vmatprep.subr.mxu0 0.0
  %283 = vmatpush2.msra.mxu0 0.0
  %284 = vmatprep.subr.mxu0 0.0
  %285 = vmatpush2.msra.mxu0 0.0
  %286 = vmatprep.subr.mxu0 0.0
  %287 = vmatpush2.msra.mxu0 0.0
  %288 = vmatprep.subr.mxu0 0.0
  %289 = vmatpush2.msra.mxu0 0.0
  %290 = vmatprep.subr.mxu0 0.0
  %291 = vmatpush2.msra.mxu0 0.0
  %292 = vmatprep.subr.mxu0 0.0
  %293 = vmatpush2.msra.mxu0 0.0
  %294 = vmatprep.subr.mxu0 0.0
  %295 = vmatpush2.msra.mxu0 0.0
  %296 = vmatprep.subr.mxu0 0.0
  %297 = vmatpush2.msra.mxu0 0.0
  %298 = vmatprep.subr.mxu0 0.0
  %299 = vmatpush2.msra.mxu0 0.0
  %300 = vmatprep.subr.mxu0 0.0
  %301 = vmatpush2.msra.mxu0 0.0
  %302 = vmatprep.subr.mxu0 0.0
  %303 = vmatpush2.msra.mxu0 0.0
  %304 = vmatprep.subr.mxu0 0.0
  %305 = vmatpush2.msra.mxu0 0.0
  %306 = vmatprep.subr.mxu0 0.0
  %307 = vmatpush2.msra.mxu0 0.0
  %308 = vmatprep.subr.mxu0 0.0
  %309 = vmatpush2.msra.mxu0 0.0
  %310 = vmatprep.mubr.f32.mxu0 0.0
  %311 = vmatmul.mubr.f32.gmra.mxu0 %v223
  %v312 = vpop.f32.mrf.mxu0
  %v313 = vadd.f32 %v184, %v312
  %v314 = vpop.f32.mrf.mxu0
  %315 = vmatprep.mubr.f32.mxu0 0.0
  %316 = vmatmul.mubr.f32.gmra.mxu0 %v226
  %v317 = vpop.f32.mrf.mxu0
  %v318 = vadd.f32 %v189, %v317
  %v319 = vpop.f32.mrf.mxu0
  %320 = vmatprep.mubr.f32.mxu0 0.0
  %321 = vmatmul.mubr.f32.gmra.mxu0 %v229
  %v322 = vpop.f32.mrf.mxu0
  %v323 = vadd.f32 %v194, %v322
  %v324 = vpop.f32.mrf.mxu0
  %325 = vmatprep.mubr.f32.mxu0 0.0
  %326 = vmatmul.mubr.f32.gmra.mxu0 %v232
  %v327 = vpop.f32.mrf.mxu0
  %v328 = vadd.f32 %v199, %v327
  %v329 = vpop.f32.mrf.mxu0
  %330 = vmatprep.mubr.f32.mxu0 0.0
  %331 = vmatmul.mubr.f32.gmra.mxu0 %v235
  %v332 = vpop.f32.mrf.mxu0
  %v333 = vadd.f32 %v204, %v332
  %v334 = vpop.f32.mrf.mxu0
  %335 = vmatprep.mubr.f32.mxu0 0.0
  %336 = vmatmul.mubr.f32.gmra.mxu0 %v238
  %v337 = vpop.f32.mrf.mxu0
  %v338 = vadd.f32 %v209, %v337
  %v339 = vpop.f32.mrf.mxu0
  %340 = vmatprep.mubr.f32.mxu0 0.0
  %341 = vmatmul.mubr.f32.gmra.mxu0 %v241
  %v342 = vpop.f32.mrf.mxu0
  %v343 = vadd.f32 %v214, %v342
  %v344 = vpop.f32.mrf.mxu0
  %345 = vmatprep.mubr.f32.mxu0 0.0
  %346 = vmatmul.mubr.f32.gmra.mxu0 %v244
  %v347 = vpop.f32.mrf.mxu0
  %v348 = vadd.f32 %v219, %v347
  %v349 = vpop.f32.mrf.mxu0
  %350 = vdwg.mxu0
  %v351 = vxor.u32 %v313, 2147483648
  %v352 = vxor.u32 %v318, 2147483648
  %v353 = vxor.u32 %v323, 2147483648
  %v354 = vxor.u32 %v328, 2147483648
  %v355 = vxor.u32 %v333, 2147483648
  %v356 = vxor.u32 %v338, 2147483648
  %v357 = vxor.u32 %v343, 2147483648
  %v358 = vxor.u32 %v348, 2147483648
  %v359 = vmul.f32 %v351, 1.442695
  %v360 = vpow.pop %v359
  %v361 = vmul.f32 %v352, 1.442695
  %v362 = vpow.pop %v361
  %v363 = vmul.f32 %v353, 1.442695
  %v364 = vpow.pop %v363
  %v365 = vmul.f32 %v354, 1.442695
  %v366 = vpow.pop %v365
  %v367 = vmul.f32 %v355, 1.442695
  %v368 = vpow.pop %v367
  %v369 = vmul.f32 %v356, 1.442695
  %v370 = vpow.pop %v369
  %v371 = vmul.f32 %v357, 1.442695
  %v372 = vpow.pop %v371
  %v373 = vmul.f32 %v358, 1.442695
  %v374 = vpow.pop %v373
  %v375 = vadd.f32 %v360, 1.0
  %v376 = vadd.f32 %v362, 1.0
  %v377 = vadd.f32 %v364, 1.0
  %v378 = vadd.f32 %v366, 1.0
  %v379 = vadd.f32 %v368, 1.0
  %v380 = vadd.f32 %v370, 1.0
  %v381 = vadd.f32 %v372, 1.0
  %v382 = vadd.f32 %v374, 1.0
  %v383 = vrcp.pop %v375
  %v384 = vmul.f32 1.0, %v383
  %v385 = vrcp.pop %v376
  %v386 = vmul.f32 1.0, %v385
  %v387 = vrcp.pop %v377
  %v388 = vmul.f32 1.0, %v387
  %v389 = vrcp.pop %v378
  %v390 = vmul.f32 1.0, %v389
  %v391 = vrcp.pop %v379
  %v392 = vmul.f32 1.0, %v391
  %v393 = vrcp.pop %v380
  %v394 = vmul.f32 1.0, %v393
  %v395 = vrcp.pop %v381
  %v396 = vmul.f32 1.0, %v395
  %v397 = vrcp.pop %v382
  %v398 = vmul.f32 1.0, %v397
  %v399 = vld [vmem:[%s5] sm:$0xff]
  %v400 = vld [vmem:[%s5 + $0x8] sm:$0xff]
  %v401 = vld [vmem:[%s5 + $0x10] sm:$0xff]
  %v402 = vld [vmem:[%s5 + $0x18] sm:$0xff]
  %v403 = vld [vmem:[%s5 + $0x20] sm:$0xff]
  %v404 = vld [vmem:[%s5 + $0x28] sm:$0xff]
  %v405 = vld [vmem:[%s5 + $0x30] sm:$0xff]
  %v406 = vld [vmem:[%s6] sm:$0xff]
  %v407 = vld [vmem:[%s6 + $0x8] sm:$0xff]
  %v408 = vld [vmem:[%s6 + $0x10] sm:$0xff]
  %v409 = vld [vmem:[%s6 + $0x18] sm:$0xff]
  %v410 = vld [vmem:[%s6 + $0x20] sm:$0xff]
  %v411 = vld [vmem:[%s6 + $0x28] sm:$0xff]
  %v412 = vld [vmem:[%s6 + $0x30] sm:$0xff]
  %414 = vset.pattern.permute.xlu0 0
  %415 = vperm.xlu0 %414, %v406
  %v416 = vpop.permute.xlu0 %415
  %419 = vset.pattern.permute.xlu0 0
  %420 = vperm.xlu0 %419, %v407
  %v421 = vpop.permute.xlu0 %420
  %424 = vset.pattern.permute.xlu0 0
  %425 = vperm.xlu0 %424, %v408
  %v426 = vpop.permute.xlu0 %425
  %429 = vset.pattern.permute.xlu0 0
  %430 = vperm.xlu0 %429, %v409
  %v431 = vpop.permute.xlu0 %430
  %434 = vset.pattern.permute.xlu0 0
  %435 = vperm.xlu0 %434, %v410
  %v436 = vpop.permute.xlu0 %435
  %439 = vset.pattern.permute.xlu0 0
  %440 = vperm.xlu0 %439, %v411
  %v441 = vpop.permute.xlu0 %440
  %444 = vset.pattern.permute.xlu0 0
  %445 = vperm.xlu0 %444, %v412
  %v446 = vpop.permute.xlu0 %445
  %vm448 = vcmask 474112
  %v450 = vsel %vm448, %v399, 0
  %v453 = vsel %vm448, %v400, 0
  %v456 = vsel %vm448, %v401, 0
  %v459 = vsel %vm448, %v402, 0
  %v462 = vsel %vm448, %v403, 0
  %v465 = vsel %vm448, %v404, 0
  %v468 = vsel %vm448, %v405, 0
  %vm470 = vcmask 1041408
  %v472 = vsel %vm470, %v398, 0
  %474 = vmatprep.subr.mxu0 0.0
  %475 = vmatpush1.msra.mxu0 0.0
  %476 = vmatprep.subr.mxu0 0.0
  %477 = vmatpush1.msra.mxu0 0.0
  %478 = vmatprep.subr.mxu0 0.0
  %479 = vmatpush1.msra.mxu0 0.0
  %480 = vmatprep.subr.mxu0 0.0
  %481 = vmatpush1.msra.mxu0 0.0
  %482 = vmatprep.subr.mxu0 0.0
  %483 = vmatpush1.msra.mxu0 0.0
  %484 = vmatprep.subr.mxu0 0.0
  %485 = vmatpush1.msra.mxu0 0.0
  %486 = vmatprep.subr.mxu0 0.0
  %487 = vmatpush1.msra.mxu0 0.0
  %488 = vmatprep.subr.mxu0 0.0
  %489 = vmatpush1.msra.mxu0 0.0
  %490 = vmatprep.subr.mxu0 0.0
  %491 = vmatpush1.msra.mxu0 %v472
  %492 = vmatprep.subr.mxu0 0.0
  %493 = vmatpush1.msra.mxu0 %v396
  %494 = vmatprep.subr.mxu0 0.0
  %495 = vmatpush1.msra.mxu0 %v394
  %496 = vmatprep.subr.mxu0 0.0
  %497 = vmatpush1.msra.mxu0 %v392
  %498 = vmatprep.subr.mxu0 0.0
  %499 = vmatpush1.msra.mxu0 %v390
  %500 = vmatprep.subr.mxu0 0.0
  %501 = vmatpush1.msra.mxu0 %v388
  %502 = vmatprep.subr.mxu0 0.0
  %503 = vmatpush1.msra.mxu0 %v386
  %504 = vmatprep.subr.mxu0 0.0
  %505 = vmatpush1.msra.mxu0 %v384
  %506 = vmatprep.subr.mxu0 0.0
  %507 = vmatpush2.msra.mxu0 0.0
  %508 = vmatprep.subr.mxu0 0.0
  %509 = vmatpush2.msra.mxu0 0.0
  %510 = vmatprep.subr.mxu0 0.0
  %511 = vmatpush2.msra.mxu0 0.0
  %512 = vmatprep.subr.mxu0 0.0
  %513 = vmatpush2.msra.mxu0 0.0
  %514 = vmatprep.subr.mxu0 0.0
  %515 = vmatpush2.msra.mxu0 0.0
  %516 = vmatprep.subr.mxu0 0.0
  %517 = vmatpush2.msra.mxu0 0.0
  %518 = vmatprep.subr.mxu0 0.0
  %519 = vmatpush2.msra.mxu0 0.0
  %520 = vmatprep.subr.mxu0 0.0
  %521 = vmatpush2.msra.mxu0 0.0
  %522 = vmatprep.subr.mxu0 0.0
  %523 = vmatpush2.msra.mxu0 0.0
  %524 = vmatprep.subr.mxu0 0.0
  %525 = vmatpush2.msra.mxu0 0.0
  %526 = vmatprep.subr.mxu0 0.0
  %527 = vmatpush2.msra.mxu0 0.0
  %528 = vmatprep.subr.mxu0 0.0
  %529 = vmatpush2.msra.mxu0 0.0
  %530 = vmatprep.subr.mxu0 0.0
  %531 = vmatpush2.msra.mxu0 0.0
  %532 = vmatprep.subr.mxu0 0.0
  %533 = vmatpush2.msra.mxu0 0.0
  %534 = vmatprep.subr.mxu0 0.0
  %535 = vmatpush2.msra.mxu0 0.0
  %536 = vmatprep.subr.mxu0 0.0
  %537 = vmatpush2.msra.mxu0 0.0
  %538 = vmatprep.mubr.f32.mxu0 0.0
  %539 = vmatmul.mubr.f32.gmra.mxu0 %v450
  %v540 = vpop.f32.mrf.mxu0
  %v541 = vadd.f32 %v416, %v540
  %v542 = vpop.f32.mrf.mxu0
  %543 = vmatprep.mubr.f32.mxu0 0.0
  %544 = vmatmul.mubr.f32.gmra.mxu0 %v453
  %v545 = vpop.f32.mrf.mxu0
  %v546 = vadd.f32 %v421, %v545
  %v547 = vpop.f32.mrf.mxu0
  %548 = vmatprep.mubr.f32.mxu0 0.0
  %549 = vmatmul.mubr.f32.gmra.mxu0 %v456
  %v550 = vpop.f32.mrf.mxu0
  %v551 = vadd.f32 %v426, %v550
  %v552 = vpop.f32.mrf.mxu0
  %553 = vmatprep.mubr.f32.mxu0 0.0
  %554 = vmatmul.mubr.f32.gmra.mxu0 %v459
  %v555 = vpop.f32.mrf.mxu0
  %v556 = vadd.f32 %v431, %v555
  %v557 = vpop.f32.mrf.mxu0
  %558 = vmatprep.mubr.f32.mxu0 0.0
  %559 = vmatmul.mubr.f32.gmra.mxu0 %v462
  %v560 = vpop.f32.mrf.mxu0
  %v561 = vadd.f32 %v436, %v560
  %v562 = vpop.f32.mrf.mxu0
  %563 = vmatprep.mubr.f32.mxu0 0.0
  %564 = vmatmul.mubr.f32.gmra.mxu0 %v465
  %v565 = vpop.f32.mrf.mxu0
  %v566 = vadd.f32 %v441, %v565
  %v567 = vpop.f32.mrf.mxu0
  %568 = vmatprep.mubr.f32.mxu0 0.0
  %569 = vmatmul.mubr.f32.gmra.mxu0 %v468
  %v570 = vpop.f32.mrf.mxu0
  %v571 = vadd.f32 %v446, %v570
  %v572 = vpop.f32.mrf.mxu0
  %573 = vdwg.mxu0
  %v574 = vxor.u32 %v541, 2147483648
  %v575 = vxor.u32 %v546, 2147483648
  %v576 = vxor.u32 %v551, 2147483648
  %v577 = vxor.u32 %v556, 2147483648
  %v578 = vxor.u32 %v561, 2147483648
  %v579 = vxor.u32 %v566, 2147483648
  %v580 = vxor.u32 %v571, 2147483648
  %v581 = vmul.f32 %v574, 1.442695
  %v582 = vpow.pop %v581
  %v583 = vmul.f32 %v575, 1.442695
  %v584 = vpow.pop %v583
  %v585 = vmul.f32 %v576, 1.442695
  %v586 = vpow.pop %v585
  %v587 = vmul.f32 %v577, 1.442695
  %v588 = vpow.pop %v587
  %v589 = vmul.f32 %v578, 1.442695
  %v590 = vpow.pop %v589
  %v591 = vmul.f32 %v579, 1.442695
  %v592 = vpow.pop %v591
  %v593 = vmul.f32 %v580, 1.442695
  %v594 = vpow.pop %v593
  %v595 = vadd.f32 %v582, 1.0
  %v596 = vadd.f32 %v584, 1.0
  %v597 = vadd.f32 %v586, 1.0
  %v598 = vadd.f32 %v588, 1.0
  %v599 = vadd.f32 %v590, 1.0
  %v600 = vadd.f32 %v592, 1.0
  %v601 = vadd.f32 %v594, 1.0
  %v602 = vrcp.pop %v595
  %v603 = vmul.f32 1.0, %v602
  %v604 = vrcp.pop %v596
  %v605 = vmul.f32 1.0, %v604
  %v606 = vrcp.pop %v597
  %v607 = vmul.f32 1.0, %v606
  %v608 = vrcp.pop %v598
  %v609 = vmul.f32 1.0, %v608
  %v610 = vrcp.pop %v599
  %v611 = vmul.f32 1.0, %v610
  %v612 = vrcp.pop %v600
  %v613 = vmul.f32 1.0, %v612
  %v614 = vrcp.pop %v601
  %v615 = vmul.f32 1.0, %v614
  %v616 = vld [vmem:[%s7] sm:$0xff]
  %v617 = vld [vmem:[%s7 + $0x8] sm:$0xff]
  %v618 = vld [vmem:[%s7 + $0x10] sm:$0xff]
  %v619 = vld [vmem:[%s7 + $0x18] sm:$0xff]
  %v620 = vld [vmem:[%s7 + $0x20] sm:$0xff]
  %v621 = vld [vmem:[%s7 + $0x28] sm:$0xff]
  %v622 = vld [vmem:[%s7 + $0x30] sm:$0xff]
  %v623 = vld [vmem:[%s8] sm:$0xff]
  %v624 = vld [vmem:[%s8 + $0x8] sm:$0xff]
  %v625 = vld [vmem:[%s8 + $0x10] sm:$0xff]
  %v626 = vld [vmem:[%s8 + $0x18] sm:$0xff]
  %v627 = vld [vmem:[%s8 + $0x20] sm:$0xff]
  %v628 = vld [vmem:[%s8 + $0x28] sm:$0xff]
  %v629 = vld [vmem:[%s8 + $0x30] sm:$0xff]
  %631 = vset.pattern.permute.xlu0 0
  %632 = vperm.xlu0 %631, %v623
  %v633 = vpop.permute.xlu0 %632
  %636 = vset.pattern.permute.xlu0 0
  %637 = vperm.xlu0 %636, %v624
  %v638 = vpop.permute.xlu0 %637
  %641 = vset.pattern.permute.xlu0 0
  %642 = vperm.xlu0 %641, %v625
  %v643 = vpop.permute.xlu0 %642
  %646 = vset.pattern.permute.xlu0 0
  %647 = vperm.xlu0 %646, %v626
  %v648 = vpop.permute.xlu0 %647
  %651 = vset.pattern.permute.xlu0 0
  %652 = vperm.xlu0 %651, %v627
  %v653 = vpop.permute.xlu0 %652
  %656 = vset.pattern.permute.xlu0 0
  %657 = vperm.xlu0 %656, %v628
  %v658 = vpop.permute.xlu0 %657
  %661 = vset.pattern.permute.xlu0 0
  %662 = vperm.xlu0 %661, %v629
  %v663 = vpop.permute.xlu0 %662
  %vm665 = vcmask 457728
  %v667 = vsel %vm665, %v616, 0
  %v670 = vsel %vm665, %v617, 0
  %v673 = vsel %vm665, %v618, 0
  %v676 = vsel %vm665, %v619, 0
  %v679 = vsel %vm665, %v620, 0
  %v682 = vsel %vm665, %v621, 0
  %v685 = vsel %vm665, %v622, 0
  %687 = vmatprep.subr.mxu0 0.0
  %688 = vmatpush1.msra.mxu0 0.0
  %689 = vmatprep.subr.mxu0 0.0
  %690 = vmatpush1.msra.mxu0 0.0
  %691 = vmatprep.subr.mxu0 0.0
  %692 = vmatpush1.msra.mxu0 0.0
  %693 = vmatprep.subr.mxu0 0.0
  %694 = vmatpush1.msra.mxu0 0.0
  %695 = vmatprep.subr.mxu0 0.0
  %696 = vmatpush1.msra.mxu0 0.0
  %697 = vmatprep.subr.mxu0 0.0
  %698 = vmatpush1.msra.mxu0 0.0
  %699 = vmatprep.subr.mxu0 0.0
  %700 = vmatpush1.msra.mxu0 0.0
  %701 = vmatprep.subr.mxu0 0.0
  %702 = vmatpush1.msra.mxu0 0.0
  %703 = vmatprep.subr.mxu0 0.0
  %704 = vmatpush1.msra.mxu0 0.0
  %705 = vmatprep.subr.mxu0 0.0
  %706 = vmatpush1.msra.mxu0 %v615
  %707 = vmatprep.subr.mxu0 0.0
  %708 = vmatpush1.msra.mxu0 %v613
  %709 = vmatprep.subr.mxu0 0.0
  %710 = vmatpush1.msra.mxu0 %v611
  %711 = vmatprep.subr.mxu0 0.0
  %712 = vmatpush1.msra.mxu0 %v609
  %713 = vmatprep.subr.mxu0 0.0
  %714 = vmatpush1.msra.mxu0 %v607
  %715 = vmatprep.subr.mxu0 0.0
  %716 = vmatpush1.msra.mxu0 %v605
  %717 = vmatprep.subr.mxu0 0.0
  %718 = vmatpush1.msra.mxu0 %v603
  %719 = vmatprep.subr.mxu0 0.0
  %720 = vmatpush2.msra.mxu0 0.0
  %721 = vmatprep.subr.mxu0 0.0
  %722 = vmatpush2.msra.mxu0 0.0
  %723 = vmatprep.subr.mxu0 0.0
  %724 = vmatpush2.msra.mxu0 0.0
  %725 = vmatprep.subr.mxu0 0.0
  %726 = vmatpush2.msra.mxu0 0.0
  %727 = vmatprep.subr.mxu0 0.0
  %728 = vmatpush2.msra.mxu0 0.0
  %729 = vmatprep.subr.mxu0 0.0
  %730 = vmatpush2.msra.mxu0 0.0
  %731 = vmatprep.subr.mxu0 0.0
  %732 = vmatpush2.msra.mxu0 0.0
  %733 = vmatprep.subr.mxu0 0.0
  %734 = vmatpush2.msra.mxu0 0.0
  %735 = vmatprep.subr.mxu0 0.0
  %736 = vmatpush2.msra.mxu0 0.0
  %737 = vmatprep.subr.mxu0 0.0
  %738 = vmatpush2.msra.mxu0 0.0
  %739 = vmatprep.subr.mxu0 0.0
  %740 = vmatpush2.msra.mxu0 0.0
  %741 = vmatprep.subr.mxu0 0.0
  %742 = vmatpush2.msra.mxu0 0.0
  %743 = vmatprep.subr.mxu0 0.0
  %744 = vmatpush2.msra.mxu0 0.0
  %745 = vmatprep.subr.mxu0 0.0
  %746 = vmatpush2.msra.mxu0 0.0
  %747 = vmatprep.subr.mxu0 0.0
  %748 = vmatpush2.msra.mxu0 0.0
  %749 = vmatprep.subr.mxu0 0.0
  %750 = vmatpush2.msra.mxu0 0.0
  %751 = vmatprep.mubr.f32.mxu0 0.0
  %752 = vmatmul.mubr.f32.gmra.mxu0 %v667
  %v753 = vpop.f32.mrf.mxu0
  %v754 = vadd.f32 %v633, %v753
  %v755 = vpop.f32.mrf.mxu0
  %756 = vmatprep.mubr.f32.mxu0 0.0
  %757 = vmatmul.mubr.f32.gmra.mxu0 %v670
  %v758 = vpop.f32.mrf.mxu0
  %v759 = vadd.f32 %v638, %v758
  %v760 = vpop.f32.mrf.mxu0
  %761 = vmatprep.mubr.f32.mxu0 0.0
  %762 = vmatmul.mubr.f32.gmra.mxu0 %v673
  %v763 = vpop.f32.mrf.mxu0
  %v764 = vadd.f32 %v643, %v763
  %v765 = vpop.f32.mrf.mxu0
  %766 = vmatprep.mubr.f32.mxu0 0.0
  %767 = vmatmul.mubr.f32.gmra.mxu0 %v676
  %v768 = vpop.f32.mrf.mxu0
  %v769 = vadd.f32 %v648, %v768
  %v770 = vpop.f32.mrf.mxu0
  %771 = vmatprep.mubr.f32.mxu0 0.0
  %772 = vmatmul.mubr.f32.gmra.mxu0 %v679
  %v773 = vpop.f32.mrf.mxu0
  %v774 = vadd.f32 %v653, %v773
  %v775 = vpop.f32.mrf.mxu0
  %776 = vmatprep.mubr.f32.mxu0 0.0
  %777 = vmatmul.mubr.f32.gmra.mxu0 %v682
  %v778 = vpop.f32.mrf.mxu0
  %v779 = vadd.f32 %v658, %v778
  %v780 = vpop.f32.mrf.mxu0
  %781 = vmatprep.mubr.f32.mxu0 0.0
  %782 = vmatmul.mubr.f32.gmra.mxu0 %v685
  %v783 = vpop.f32.mrf.mxu0
  %v784 = vadd.f32 %v663, %v783
  %v785 = vpop.f32.mrf.mxu0
  %786 = vdwg.mxu0
  %v787 = vxor.u32 %v754, 2147483648
  %v788 = vxor.u32 %v759, 2147483648
  %v789 = vxor.u32 %v764, 2147483648
  %v790 = vxor.u32 %v769, 2147483648
  %v791 = vxor.u32 %v774, 2147483648
  %v792 = vxor.u32 %v779, 2147483648
  %v793 = vxor.u32 %v784, 2147483648
  %v794 = vmul.f32 %v787, 1.442695
  %v795 = vpow.pop %v794
  %v796 = vmul.f32 %v788, 1.442695
  %v797 = vpow.pop %v796
  %v798 = vmul.f32 %v789, 1.442695
  %v799 = vpow.pop %v798
  %v800 = vmul.f32 %v790, 1.442695
  %v801 = vpow.pop %v800
  %v802 = vmul.f32 %v791, 1.442695
  %v803 = vpow.pop %v802
  %v804 = vmul.f32 %v792, 1.442695
  %v805 = vpow.pop %v804
  %v806 = vmul.f32 %v793, 1.442695
  %v807 = vpow.pop %v806
  %v808 = vadd.f32 %v795, 1.0
  %v809 = vadd.f32 %v797, 1.0
  %v810 = vadd.f32 %v799, 1.0
  %v811 = vadd.f32 %v801, 1.0
  %v812 = vadd.f32 %v803, 1.0
  %v813 = vadd.f32 %v805, 1.0
  %v814 = vadd.f32 %v807, 1.0
  %v815 = vrcp.pop %v808
  %v816 = vmul.f32 1.0, %v815
  %v817 = vrcp.pop %v809
  %v818 = vmul.f32 1.0, %v817
  %v819 = vrcp.pop %v810
  %v820 = vmul.f32 1.0, %v819
  %v821 = vrcp.pop %v811
  %v822 = vmul.f32 1.0, %v821
  %v823 = vrcp.pop %v812
  %v824 = vmul.f32 1.0, %v823
  %v825 = vrcp.pop %v813
  %v826 = vmul.f32 1.0, %v825
  %v827 = vrcp.pop %v814
  %v828 = vmul.f32 1.0, %v827
  %v829 = vld [vmem:[%s9] sm:$0xff]
  %v830 = vld [vmem:[%s9 + $0x8] sm:$0xff]
  %v831 = vld [vmem:[%s10] sm:$0xff]
  %v832 = vld [vmem:[%s10 + $0x8] sm:$0xff]
  %834 = vset.pattern.permute.xlu0 0
  %835 = vperm.xlu0 %834, %v831
  %v836 = vpop.permute.xlu0 %835
  %839 = vset.pattern.permute.xlu0 0
  %840 = vperm.xlu0 %839, %v832
  %v841 = vpop.permute.xlu0 %840
  %v844 = vsel %vm665, %v829, 0
  %v847 = vsel %vm665, %v830, 0
  %849 = vmatprep.subr.mxu0 0.0
  %850 = vmatpush1.msra.mxu0 0.0
  %851 = vmatprep.subr.mxu0 0.0
  %852 = vmatpush1.msra.mxu0 0.0
  %853 = vmatprep.subr.mxu0 0.0
  %854 = vmatpush1.msra.mxu0 0.0
  %855 = vmatprep.subr.mxu0 0.0
  %856 = vmatpush1.msra.mxu0 0.0
  %857 = vmatprep.subr.mxu0 0.0
  %858 = vmatpush1.msra.mxu0 0.0
  %859 = vmatprep.subr.mxu0 0.0
  %860 = vmatpush1.msra.mxu0 0.0
  %861 = vmatprep.subr.mxu0 0.0
  %862 = vmatpush1.msra.mxu0 0.0
  %863 = vmatprep.subr.mxu0 0.0
  %864 = vmatpush1.msra.mxu0 0.0
  %865 = vmatprep.subr.mxu0 0.0
  %866 = vmatpush1.msra.mxu0 0.0
  %867 = vmatprep.subr.mxu0 0.0
  %868 = vmatpush1.msra.mxu0 %v828
  %869 = vmatprep.subr.mxu0 0.0
  %870 = vmatpush1.msra.mxu0 %v826
  %871 = vmatprep.subr.mxu0 0.0
  %872 = vmatpush1.msra.mxu0 %v824
  %873 = vmatprep.subr.mxu0 0.0
  %874 = vmatpush1.msra.mxu0 %v822
  %875 = vmatprep.subr.mxu0 0.0
  %876 = vmatpush1.msra.mxu0 %v820
  %877 = vmatprep.subr.mxu0 0.0
  %878 = vmatpush1.msra.mxu0 %v818
  %879 = vmatprep.subr.mxu0 0.0
  %880 = vmatpush1.msra.mxu0 %v816
  %881 = vmatprep.subr.mxu0 0.0
  %882 = vmatpush2.msra.mxu0 0.0
  %883 = vmatprep.subr.mxu0 0.0
  %884 = vmatpush2.msra.mxu0 0.0
  %885 = vmatprep.subr.mxu0 0.0
  %886 = vmatpush2.msra.mxu0 0.0
  %887 = vmatprep.subr.mxu0 0.0
  %888 = vmatpush2.msra.mxu0 0.0
  %889 = vmatprep.subr.mxu0 0.0
  %890 = vmatpush2.msra.mxu0 0.0
  %891 = vmatprep.subr.mxu0 0.0
  %892 = vmatpush2.msra.mxu0 0.0
  %893 = vmatprep.subr.mxu0 0.0
  %894 = vmatpush2.msra.mxu0 0.0
  %895 = vmatprep.subr.mxu0 0.0
  %896 = vmatpush2.msra.mxu0 0.0
  %897 = vmatprep.subr.mxu0 0.0
  %898 = vmatpush2.msra.mxu0 0.0
  %899 = vmatprep.subr.mxu0 0.0
  %900 = vmatpush2.msra.mxu0 0.0
  %901 = vmatprep.subr.mxu0 0.0
  %902 = vmatpush2.msra.mxu0 0.0
  %903 = vmatprep.subr.mxu0 0.0
  %904 = vmatpush2.msra.mxu0 0.0
  %905 = vmatprep.subr.mxu0 0.0
  %906 = vmatpush2.msra.mxu0 0.0
  %907 = vmatprep.subr.mxu0 0.0
  %908 = vmatpush2.msra.mxu0 0.0
  %909 = vmatprep.subr.mxu0 0.0
  %910 = vmatpush2.msra.mxu0 0.0
  %911 = vmatprep.subr.mxu0 0.0
  %912 = vmatpush2.msra.mxu0 0.0
  %913 = vmatprep.mubr.f32.mxu0 0.0
  %914 = vmatmul.mubr.f32.gmra.mxu0 %v844
  %v915 = vpop.f32.mrf.mxu0
  %v916 = vadd.f32 %v836, %v915
  %v917 = vpop.f32.mrf.mxu0
  %918 = vmatprep.mubr.f32.mxu0 0.0
  %919 = vmatmul.mubr.f32.gmra.mxu0 %v847
  %v920 = vpop.f32.mrf.mxu0
  %v921 = vadd.f32 %v841, %v920
  %v922 = vpop.f32.mrf.mxu0
  %923 = vdwg.mxu0
  %v924 = vtanh.pop %v916
  %v925 = vtanh.pop %v921
  %926 = vst [vmem:[%s11] sm:$0xff] %v924
  %927 = vst [vmem:[%s11 + $0x8] sm:$0xff] %v925
  // Predicated region
  $region46: #{eve_forward.1} parent=0 // pred_check
    _
  $region47: #{eve_forward.1} parent=0 // pred_check_branch
    %929 = sbr.rel (0) target = $region49
  $region48: #{eve_forward.1} parent=0 // pred_region
    _
  $region49: #{eve_forward.1} parent=0 // pred_fallthru
    _
  // Predicated region
  $region50: #{eve_forward.1} parent=0 // pred_check
    _
  $region51: #{eve_forward.1} parent=0 // pred_check_branch
    %931 = sbr.rel (0) target = $region53
  $region52: #{eve_forward.1} parent=0 // pred_region
    _
  $region53: #{eve_forward.1} parent=0 // pred_fallthru
    _

</llo_original>
